<compile_context>
chip_gen: v6e
topology: v6e:2x2x1
jax: 0.10.0
libtpu: 0.0.40
codegen_flags: <defaults>
</compile_context>

<pallas_src>
import functools

import jax
import jax.numpy as jnp
from jax.experimental import pallas as pl
from jax.experimental.pallas import tpu as pltpu

EPS = 1e-5


# ------------------------------ kernels ---------------------------------- #

def conv_stats_kernel(p_ref, w_ref, y_ref, sum_ref, sq_ref):
    # p_ref : (TM, K)   bf16 im2col patch tile
    # w_ref : (K,  C)   bf16 reshaped conv weight
    # y_ref : (TM, C)   f32 conv output tile
    # sum_ref / sq_ref : (1, 1, C) f32 per-tile partial statistics
    acc = jnp.dot(p_ref[...], w_ref[...], preferred_element_type=jnp.float32)
    y_ref[...] = acc
    c = acc.shape[-1]
    sum_ref[...] = jnp.sum(acc, axis=0, keepdims=True).reshape(1, 1, c)
    sq_ref[...] = jnp.sum(acc * acc, axis=0, keepdims=True).reshape(1, 1, c)


def bn_act_kernel(y_ref, scale_ref, shift_ref, o_ref, *, relu):
    # y_ref: (TM, C) f32; scale/shift: (1, C) f32 (broadcast over rows)
    v = y_ref[...] * scale_ref[...] + shift_ref[...]
    o_ref[...] = jnp.maximum(v, 0.0) if relu else v


# ------------------------------ wrapper ----------------------------------- #

def _round_up(a, b):
    return ((a + b - 1) // b) * b


def conv_block2d(x_nchw, w_hwio, gamma, beta, *, relu=True, tile_m=512):
    """ConvBlock2d forward. x: (N,Cin,H,W); w: (kh,kw,Cin,Cout) -> (N,Cout,H,W)."""
    N, Cin, H, W = x_nchw.shape
    kh, kw, wcin, Cout = w_hwio.shape
    assert wcin == Cin

    x = jnp.transpose(x_nchw, (0, 2, 3, 1)).astype(jnp.float32)  # NHWC

    # 'same' padding, stride 1 (torch padding='same' semantics).
    ph0, ph1 = (kh - 1) // 2, kh // 2
    pw0, pw1 = (kw - 1) // 2, kw // 2
    xp = jnp.pad(x, ((0, 0), (ph0, ph1), (pw0, pw1), (0, 0)))

    # im2col in the wrapper: kernel sees an already-2D, lane-dense operand.
    M = N * H * W
    K = kh * kw * Cin
    taps = [xp[:, dh:dh + H, dw:dw + W, :] for dh in range(kh) for dw in range(kw)]
    patches = jnp.concatenate(taps, axis=-1).reshape(M, K)

    # Tile the M axis (pad rows to a multiple of the tile; zero rows contribute
    # nothing to the statistics and are sliced off at the end).
    tm = min(tile_m, _round_up(M, 8))
    Mpad = _round_up(M, tm)
    G = Mpad // tm
    patches = jnp.pad(patches, ((0, Mpad - M), (0, 0))).astype(jnp.bfloat16)
    w2 = w_hwio.reshape(K, Cout).astype(jnp.bfloat16)

    # ---- pass 1: conv matmul + per-tile partial BN statistics -------------
    y, psum, psq = pl.pallas_call(
        conv_stats_kernel,
        grid=(G,),
        in_specs=[
            pl.BlockSpec((tm, K), lambda i: (i, 0)),
            pl.BlockSpec((K, Cout), lambda i: (0, 0)),
        ],
        out_specs=[
            pl.BlockSpec((tm, Cout), lambda i: (i, 0)),
            pl.BlockSpec((1, 1, Cout), lambda i: (i, 0, 0)),
            pl.BlockSpec((1, 1, Cout), lambda i: (i, 0, 0)),
        ],
        out_shape=[
            jax.ShapeDtypeStruct((Mpad, Cout), jnp.float32),
            jax.ShapeDtypeStruct((G, 1, Cout), jnp.float32),
            jax.ShapeDtypeStruct((G, 1, Cout), jnp.float32),
        ],
        compiler_params=pltpu.CompilerParams(dimension_semantics=("parallel",)),
    )(patches, w2)

    # ---- fold statistics into per-channel scale/shift (tiny XLA ops) ------
    tot = jnp.sum(psum[:, 0, :], axis=0)          # (Cout,)
    tot2 = jnp.sum(psq[:, 0, :], axis=0)          # (Cout,)
    mean = tot / M
    var = tot2 / M - mean * mean                  # biased variance (training BN)
    scale = gamma.astype(jnp.float32) * jax.lax.rsqrt(var + EPS)
    shift = beta.astype(jnp.float32) - mean * scale

    # ---- pass 2: normalize (+ ReLU) per tile -------------------------------
    out2d = pl.pallas_call(
        functools.partial(bn_act_kernel, relu=relu),
        grid=(G,),
        in_specs=[
            pl.BlockSpec((tm, Cout), lambda i: (i, 0)),
            pl.BlockSpec((1, Cout), lambda i: (0, 0)),
            pl.BlockSpec((1, Cout), lambda i: (0, 0)),
        ],
        out_specs=pl.BlockSpec((tm, Cout), lambda i: (i, 0)),
        out_shape=jax.ShapeDtypeStruct((Mpad, Cout), jnp.float32),
        compiler_params=pltpu.CompilerParams(dimension_semantics=("parallel",)),
    )(y, scale.reshape(1, Cout), shift.reshape(1, Cout))

    out = out2d[:M].reshape(N, H, W, Cout)
    return jnp.transpose(out, (0, 3, 1, 2))       # back to NCHW


# --------------------------- pure-JAX reference ---------------------------- #

def _reference(x_nchw, w_hwio, gamma, beta, relu=True):
    y = jax.lax.conv_general_dilated(
        x_nchw.astype(jnp.float32),
        jnp.transpose(w_hwio, (3, 2, 0, 1)).astype(jnp.float32),
        window_strides=(1, 1), padding="SAME",
        dimension_numbers=("NCHW", "OIHW", "NCHW"))
    mean = jnp.mean(y, axis=(0, 2, 3), keepdims=True)
    var = jnp.mean((y - mean) ** 2, axis=(0, 2, 3), keepdims=True)
    yn = (y - mean) * jax.lax.rsqrt(var + EPS)
    yn = yn * gamma.reshape(1, -1, 1, 1) + beta.reshape(1, -1, 1, 1)
    return jnp.maximum(yn, 0.0) if relu else yn


# ------------------------------- main -------------------------------------- #

if __name__ == "__main__":
    key = jax.random.PRNGKey(0)
    kx, kw_, kg, kb = jax.random.split(key, 4)

    N, Cin, H, W = 2, 4, 16, 16
    Cout, ksz = 12, 3

    x = jax.random.normal(kx, (N, Cin, H, W), jnp.float32)
    w = 0.1 * jax.random.normal(kw_, (ksz, ksz, Cin, Cout), jnp.float32)
    gamma = 1.0 + 0.1 * jax.random.normal(kg, (Cout,), jnp.float32)
    beta = 0.1 * jax.random.normal(kb, (Cout,), jnp.float32)

    fwd = jax.jit(functools.partial(conv_block2d, relu=True, tile_m=256))
    out = jax.block_until_ready(fwd(x, w, gamma, beta))

    assert out.shape == (N, Cout, H, W)
    assert bool(jnp.all(jnp.isfinite(out)))
    assert bool(jnp.all(out >= 0.0))  # ReLU output

    ref = _reference(x, w, gamma, beta, relu=True)
    max_err = float(jnp.max(jnp.abs(out - ref)))
    assert max_err < 5e-2, f"max abs err vs reference: {max_err}"

    print("KERNEL_OK")
</pallas_src>

<mosaic_0001>
module attributes {stable_mosaic.version = 11 : i64} {
  func.func @conv_stats_kernel(%arg0: i32, %arg1: memref<256x36xbf16, #tpu.memory_space<vmem>>, %arg2: memref<36x12xbf16, #tpu.memory_space<vmem>>, %arg3: memref<256x12xf32, #tpu.memory_space<vmem>>, %arg4: memref<1x1x12xf32, #tpu.memory_space<vmem>>, %arg5: memref<1x1x12xf32, #tpu.memory_space<vmem>>) attributes {dimension_semantics = [#tpu.dimension_semantics<parallel>], iteration_bounds = array<i64: 2>, scalar_prefetch = 0 : i64, scratch_operands = 0 : i64, tpu.core_type = #tpu.core_type<tc>, window_params = [{transform_indices = @transform_0, window_bounds = array<i64: 256, 36>}, {pipeline_mode = #tpu.pipeline_mode<synchronous>, transform_indices = @transform_1, window_bounds = array<i64: 36, 12>}, {transform_indices = @transform_2, window_bounds = array<i64: 256, 12>}, {transform_indices = @transform_3, window_bounds = array<i64: 1, 1, 12>}, {transform_indices = @transform_4, window_bounds = array<i64: 1, 1, 12>}]} {
    %c0 = arith.constant 0 : index
    %c0_0 = arith.constant 0 : index
    %0 = vector.load %arg1[%c0, %c0_0] : memref<256x36xbf16, #tpu.memory_space<vmem>>, vector<256x36xbf16>
    %c0_1 = arith.constant 0 : index
    %c0_2 = arith.constant 0 : index
    %1 = vector.load %arg2[%c0_1, %c0_2] : memref<36x12xbf16, #tpu.memory_space<vmem>>, vector<36x12xbf16>
    %cst = arith.constant dense<0.000000e+00> : vector<256x12xf32>
    %2 = tpu.matmul %0, %1, %cst {dimension_numbers = #tpu.dot_dimension_numbers<[1], [0], [0], [1], [0, 0, 1, 1], [], []>} : vector<256x36xbf16>, vector<36x12xbf16>, vector<256x12xf32> -> vector<256x12xf32>
    %c0_3 = arith.constant 0 : index
    %c0_4 = arith.constant 0 : index
    %3 = vector.load %arg3[%c0_3, %c0_4] : memref<256x12xf32, #tpu.memory_space<vmem>>, vector<256x12xf32>
    tpu.vector_store %arg3[%c0_3, %c0_4], %2 {strides = array<i32>} : memref<256x12xf32, #tpu.memory_space<vmem>>, vector<256x12xf32>,
    %cst_5 = arith.constant dense<0.000000e+00> : vector<12xf32>
    %4 = vector.multi_reduction <add>, %2, %cst_5 [0] : vector<256x12xf32> to vector<12xf32>
    %5 = vector.shape_cast %4 : vector<12xf32> to vector<1x12xf32>
    %6 = vector.shape_cast %5 : vector<1x12xf32> to vector<1x1x12xf32>
    %c0_6 = arith.constant 0 : index
    %c0_7 = arith.constant 0 : index
    %c0_8 = arith.constant 0 : index
    %7 = vector.load %arg4[%c0_6, %c0_7, %c0_8] : memref<1x1x12xf32, #tpu.memory_space<vmem>>, vector<1x1x12xf32>
    tpu.vector_store %arg4[%c0_6, %c0_7, %c0_8], %6 {strides = array<i32>} : memref<1x1x12xf32, #tpu.memory_space<vmem>>, vector<1x1x12xf32>,
    %8 = arith.mulf %2, %2 : vector<256x12xf32>
    %cst_9 = arith.constant dense<0.000000e+00> : vector<12xf32>
    %9 = vector.multi_reduction <add>, %8, %cst_9 [0] : vector<256x12xf32> to vector<12xf32>
    %10 = vector.shape_cast %9 : vector<12xf32> to vector<1x12xf32>
    %11 = vector.shape_cast %10 : vector<1x12xf32> to vector<1x1x12xf32>
    %c0_10 = arith.constant 0 : index
    %c0_11 = arith.constant 0 : index
    %c0_12 = arith.constant 0 : index
    %12 = vector.load %arg5[%c0_10, %c0_11, %c0_12] : memref<1x1x12xf32, #tpu.memory_space<vmem>>, vector<1x1x12xf32>
    tpu.vector_store %arg5[%c0_10, %c0_11, %c0_12], %11 {strides = array<i32>} : memref<1x1x12xf32, #tpu.memory_space<vmem>>, vector<1x1x12xf32>,
    return
  }
  func.func @transform_0(%arg0: i32) -> (i32, i32) {
    %c0_i32 = arith.constant 0 : i32
    %c0_i32_0 = arith.constant 0 : i32
    return %arg0, %c0_i32 : i32, i32
  }
  func.func @transform_1(%arg0: i32) -> (i32, i32) {
    %c0_i32 = arith.constant 0 : i32
    %c0_i32_0 = arith.constant 0 : i32
    %c0_i32_1 = arith.constant 0 : i32
    return %c0_i32, %c0_i32_0 : i32, i32
  }
  func.func @transform_2(%arg0: i32) -> (i32, i32) {
    %c0_i32 = arith.constant 0 : i32
    %c0_i32_0 = arith.constant 0 : i32
    return %arg0, %c0_i32 : i32, i32
  }
  func.func @transform_3(%arg0: i32) -> (i32, i32, i32) {
    %c0_i32 = arith.constant 0 : i32
    %c0_i32_0 = arith.constant 0 : i32
    %c0_i32_1 = arith.constant 0 : i32
    return %arg0, %c0_i32, %c0_i32_0 : i32, i32, i32
  }
  func.func @transform_4(%arg0: i32) -> (i32, i32, i32) {
    %c0_i32 = arith.constant 0 : i32
    %c0_i32_0 = arith.constant 0 : i32
    %c0_i32_1 = arith.constant 0 : i32
    return %arg0, %c0_i32, %c0_i32_0 : i32, i32, i32
  }
}

module attributes {stable_mosaic.version = 11 : i64} {
  func.func @bn_act_kernel(%arg0: i32, %arg1: memref<256x12xf32, #tpu.memory_space<vmem>>, %arg2: memref<1x12xf32, #tpu.memory_space<vmem>>, %arg3: memref<1x12xf32, #tpu.memory_space<vmem>>, %arg4: memref<256x12xf32, #tpu.memory_space<vmem>>) attributes {dimension_semantics = [#tpu.dimension_semantics<parallel>], iteration_bounds = array<i64: 2>, scalar_prefetch = 0 : i64, scratch_operands = 0 : i64, tpu.core_type = #tpu.core_type<tc>, window_params = [{transform_indices = @transform_0, window_bounds = array<i64: 256, 12>}, {pipeline_mode = #tpu.pipeline_mode<synchronous>, transform_indices = @transform_1, window_bounds = array<i64: 1, 12>}, {pipeline_mode = #tpu.pipeline_mode<synchronous>, transform_indices = @transform_2, window_bounds = array<i64: 1, 12>}, {transform_indices = @transform_3, window_bounds = array<i64: 256, 12>}]} {
    %c0 = arith.constant 0 : index
    %c0_0 = arith.constant 0 : index
    %0 = vector.load %arg1[%c0, %c0_0] : memref<256x12xf32, #tpu.memory_space<vmem>>, vector<256x12xf32>
    %c0_1 = arith.constant 0 : index
    %c0_2 = arith.constant 0 : index
    %1 = vector.load %arg2[%c0_1, %c0_2] : memref<1x12xf32, #tpu.memory_space<vmem>>, vector<1x12xf32>
    %2 = vector.broadcast %1 : vector<1x12xf32> to vector<256x12xf32>
    %3 = arith.mulf %0, %2 : vector<256x12xf32>
    %c0_3 = arith.constant 0 : index
    %c0_4 = arith.constant 0 : index
    %4 = vector.load %arg3[%c0_3, %c0_4] : memref<1x12xf32, #tpu.memory_space<vmem>>, vector<1x12xf32>
    %5 = vector.broadcast %4 : vector<1x12xf32> to vector<256x12xf32>
    %6 = arith.addf %3, %5 : vector<256x12xf32>
    %cst = arith.constant 0.000000e+00 : f32
    %7 = vector.broadcast %cst : f32 to vector<256x12xf32>
    %8 = arith.maximumf %6, %7 : vector<256x12xf32>
    %c0_5 = arith.constant 0 : index
    %c0_6 = arith.constant 0 : index
    %9 = vector.load %arg4[%c0_5, %c0_6] : memref<256x12xf32, #tpu.memory_space<vmem>>, vector<256x12xf32>
    tpu.vector_store %arg4[%c0_5, %c0_6], %8 {strides = array<i32>} : memref<256x12xf32, #tpu.memory_space<vmem>>, vector<256x12xf32>,
    return
  }
  func.func @transform_0(%arg0: i32) -> (i32, i32) {
    %c0_i32 = arith.constant 0 : i32
    %c0_i32_0 = arith.constant 0 : i32
    return %arg0, %c0_i32 : i32, i32
  }
  func.func @transform_1(%arg0: i32) -> (i32, i32) {
    %c0_i32 = arith.constant 0 : i32
    %c0_i32_0 = arith.constant 0 : i32
    %c0_i32_1 = arith.constant 0 : i32
    return %c0_i32, %c0_i32_0 : i32, i32
  }
  func.func @transform_2(%arg0: i32) -> (i32, i32) {
    %c0_i32 = arith.constant 0 : i32
    %c0_i32_0 = arith.constant 0 : i32
    %c0_i32_1 = arith.constant 0 : i32
    return %c0_i32, %c0_i32_0 : i32, i32
  }
  func.func @transform_3(%arg0: i32) -> (i32, i32) {
    %c0_i32 = arith.constant 0 : i32
    %c0_i32_0 = arith.constant 0 : i32
    return %arg0, %c0_i32 : i32, i32
  }
}

</mosaic_0001>

<llo_original>
// kernel: conv_block2d.3
$region0: #{conv_block2d.3}
  #allocation0 [shape = 'u32[]', space=smem, size = 0x4, offset = 0x4, fixed_abs, tag = 'smem constant byte address 0x4 - core index']
  #allocation1 [shape = 'u32[144,128]{1,0:T(1,128)}', space=vmem, size = 0x12000, scoped, tag = 'internal scratch']
  %s0 = inlined_call_operand.vmem [shape: f32[512,12], index: 0, kind: input, shape index: {}]
  %s1 = inlined_call_operand.vmem [shape: f32[1,12], index: 1, kind: input, shape index: {}]
  %s2 = inlined_call_operand.vmem [shape: f32[1,12], index: 2, kind: input, shape index: {}]
  %s3 = inlined_call_operand.vmem [shape: f32[512,12], index: 3, kind: output, shape index: {}]
  %s4 = sld [smem:[#allocation0]]
  $region45: #{conv_block2d.3} parent=0
    _
  %s6 = ssub.s32 1, %s4
  %s7 = scalar_select 0, %s6, %s4
  loop: start=0, step=1, limit=4
  $region2: #{conv_block2d.3} parent=0 // loop_pre_header
    _
  $region3: #{conv_block2d.3} parent=0 // loop_header
    %s9 = sphi 0, %s13
    %p10 = scmp.ge.s32.totalorder %s9, 4
    %s19 = sphi 0, %s21
    %s22 = sphi 0, %s19
    %s23 = sphi 0, %s22
    %s39 = sphi 0, %s23
    %s43 = sphi 0, %s43
    %s45 = sphi 0, %s43
    %s46 = sphi 0, %s45
    %s60 = sphi 0, %s46
    %s64 = sphi 0, %s64
    %s66 = sphi 0, %s64
    %s67 = sphi 0, %s66
    %s81 = sphi 0, %s67
    %s87 = sphi 0, %s89
    %s90 = sphi 0, %s87
    %s91 = sphi 0, %s90
    %s107 = sphi 0, %s91
  $region4: #{conv_block2d.3} parent=0 // loop_header_branch
    %12 = sbr.rel (%p10) target = $region8
  $region5: #{conv_block2d.3} parent=0 // loop_body
    %s14 = ssub.s32 %s9, 1
    %s15 = ssub.s32 %s9, 2
    %s16 = sadd.s32 %s9, 1
    %s17 = ssub.s32 %s9, %s16
    %p18 = scmp.eq.s32.totalorder %s17, 0
    %s20 = sadd.s32 %s19, 1
    %s21 = scalar_select %p18, %s19, %s20
    %p24 = pneg %p18
    %p25 = scmp.eq.s32.totalorder %s9, 1
    %p26 = por %p24, %p25
    %p27 = scmp.ne.s32.totalorder %s19, %s22
    %p28 = scmp.eq.s32.totalorder %s9, 0
    %p29 = por %p27, %p28
    %p30 = scmp.ne.s32.totalorder %s19, %s22
    %p31 = scmp.eq.s32.totalorder %s14, 1
    %p32 = por %p30, %p31
    %p33 = scmp.ne.s32.totalorder %s22, %s23
    %p34 = scmp.eq.s32.totalorder %s14, 0
    %p35 = por %p33, %p34
    %p36 = scmp.ne.s32.totalorder %s22, %s23
    %p37 = scmp.eq.s32.totalorder %s15, 1
    %p38 = por %p36, %p37
    %p40 = scmp.ne.s32.totalorder %s23, %s39
    %p41 = scmp.eq.s32.totalorder %s15, 0
    %p42 = por %p40, %p41
    %s44 = sadd.s32 %s43, 1
    %p47 = scmp.eq.s32.totalorder %s9, 1
    %p48 = scmp.ne.s32.totalorder %s43, %s45
    %p49 = scmp.eq.s32.totalorder %s9, 0
    %p50 = por %p48, %p49
    %p51 = scmp.ne.s32.totalorder %s43, %s45
    %p52 = scmp.eq.s32.totalorder %s14, 1
    %p53 = por %p51, %p52
    %p54 = scmp.ne.s32.totalorder %s45, %s46
    %p55 = scmp.eq.s32.totalorder %s14, 0
    %p56 = por %p54, %p55
    %p57 = scmp.ne.s32.totalorder %s45, %s46
    %p58 = scmp.eq.s32.totalorder %s15, 1
    %p59 = por %p57, %p58
    %p61 = scmp.ne.s32.totalorder %s46, %s60
    %p62 = scmp.eq.s32.totalorder %s15, 0
    %p63 = por %p61, %p62
    %s65 = sadd.s32 %s64, 1
    %p68 = scmp.eq.s32.totalorder %s9, 1
    %p69 = scmp.ne.s32.totalorder %s64, %s66
    %p70 = scmp.eq.s32.totalorder %s9, 0
    %p71 = por %p69, %p70
    %p72 = scmp.ne.s32.totalorder %s64, %s66
    %p73 = scmp.eq.s32.totalorder %s14, 1
    %p74 = por %p72, %p73
    %p75 = scmp.ne.s32.totalorder %s66, %s67
    %p76 = scmp.eq.s32.totalorder %s14, 0
    %p77 = por %p75, %p76
    %p78 = scmp.ne.s32.totalorder %s66, %s67
    %p79 = scmp.eq.s32.totalorder %s15, 1
    %p80 = por %p78, %p79
    %p82 = scmp.ne.s32.totalorder %s67, %s81
    %p83 = scmp.eq.s32.totalorder %s15, 0
    %p84 = por %p82, %p83
    %s85 = ssub.s32 %s9, %s16
    %p86 = scmp.eq.s32.totalorder %s85, 0
    %s88 = sadd.s32 %s87, 1
    %s89 = scalar_select %p86, %s87, %s88
    %p92 = pneg %p86
    %p93 = scmp.eq.s32.totalorder %s9, 1
    %p94 = por %p92, %p93
    %p95 = scmp.ne.s32.totalorder %s87, %s90
    %p96 = scmp.eq.s32.totalorder %s9, 0
    %p97 = por %p95, %p96
    %p98 = scmp.ne.s32.totalorder %s87, %s90
    %p99 = scmp.eq.s32.totalorder %s14, 1
    %p100 = por %p98, %p99
    %p101 = scmp.ne.s32.totalorder %s90, %s91
    %p102 = scmp.eq.s32.totalorder %s14, 0
    %p103 = por %p101, %p102
    %p104 = scmp.ne.s32.totalorder %s90, %s91
    %p105 = scmp.eq.s32.totalorder %s15, 1
    %p106 = por %p104, %p105
    %p108 = scmp.ne.s32.totalorder %s91, %s107
    %p109 = scmp.eq.s32.totalorder %s15, 0
    %p110 = por %p108, %p109
    %p111 = scmp.le.s32.totalorder 1, %s9
    %p112 = scmp.lt.s32.totalorder %s9, 3
    %p113 = pnand %p111, %p112
    %p114 = pneg %p113
    // Predicated region
    $region9: #{conv_block2d.3} parent=5 // pred_check
      _
    $region10: #{conv_block2d.3} parent=5 // pred_check_branch
      %116 = sbr.rel (%p113) target = $region12
    $region11: #{conv_block2d.3} parent=5 // pred_region
      %s117 = ssub.s32 %s9, 1
      // Predicated region
      $region13: #{conv_block2d.3} parent=11 // pred_check
        %p118 = pneg %p56
      $region14: #{conv_block2d.3} parent=11 // pred_check_branch
        %120 = sbr.rel (%p118) target = $region16
      $region15: #{conv_block2d.3} parent=11 // pred_region
        _
      $region16: #{conv_block2d.3} parent=11 // pred_fallthru
        _
      // Predicated region
      $region17: #{conv_block2d.3} parent=11 // pred_check
        %p121 = pneg %p77
      $region18: #{conv_block2d.3} parent=11 // pred_check_branch
        %123 = sbr.rel (%p121) target = $region20
      $region19: #{conv_block2d.3} parent=11 // pred_region
        _
      $region20: #{conv_block2d.3} parent=11 // pred_fallthru
        _
    $region12: #{conv_block2d.3} parent=5 // pred_fallthru
      _
    %p124 = scmp.lt.s32.totalorder %s9, 2
    // Predicated region
    $region21: #{conv_block2d.3} parent=5 // pred_check
      %p125 = pneg %p124
    $region22: #{conv_block2d.3} parent=5 // pred_check_branch
      %127 = sbr.rel (%p125) target = $region24
    $region23: #{conv_block2d.3} parent=5 // pred_region
      // Predicated region
      $region25: #{conv_block2d.3} parent=23 // pred_check
        %p128 = pneg %p29
      $region26: #{conv_block2d.3} parent=23 // pred_check_branch
        %130 = sbr.rel (%p128) target = $region28
      $region27: #{conv_block2d.3} parent=23 // pred_region
        %s131 = smul.u32 32, %s9
        %p132 = scmp.lt.s32.totalorder %s131, 63
        %s133 = scalar_select %p132, %s131, 63
        %s134 = smul.addr %s133, 8
        %s135 = scalar_lea.vmem %s0, %s134
        %s136 = smul.u32 32, %s9
      $region28: #{conv_block2d.3} parent=23 // pred_fallthru
        _
    $region24: #{conv_block2d.3} parent=5 // pred_fallthru
      _
    %p137 = scmp.le.s32.totalorder 1, %s9
    %p138 = scmp.lt.s32.totalorder %s9, 3
    %p139 = pnand %p137, %p138
    %p140 = pneg %p139
    // Predicated region
    $region29: #{conv_block2d.3} parent=5 // pred_check
      _
    $region30: #{conv_block2d.3} parent=5 // pred_check_branch
      %142 = sbr.rel (%p139) target = $region32
    $region31: #{conv_block2d.3} parent=5 // pred_region
      %s143 = ssub.s32 %s9, 1
      %s144 = smul.u32 32, %s14
      %p145 = scmp.lt.s32.totalorder %s144, 63
      %s146 = scalar_select %p145, %s144, 63
      %s147 = smul.addr %s146, 8
      %s148 = scalar_lea.vmem %s0, %s147
      %p149 = pneg %p35
      %p150 = pneg %p32
      %p151 = pneg %p56
      %p152 = pneg %p53
      %p153 = pneg %p77
      %p154 = pneg %p74
      %p155 = pneg %p103
      %p156 = pneg %p100
      %s157 = smul.u32 32, %s14
      %p158 = scmp.lt.s32.totalorder %s157, 63
      %s159 = scalar_select %p158, %s157, 63
      %s160 = smul.addr %s159, 8
      %s161 = scalar_lea.vmem %s3, %s160
      %s162 = smul.u32 32, %s14
      %p163 = scmp.lt.s32.totalorder %s162, 63
      %s164 = scalar_select %p163, %s162, 63
      %s165 = smul.addr %s164, 8
      %s166 = scalar_lea.vmem %s0, %s165
      %s167 = smul.u32 32, %s14
      %s168 = smul.u32 32, %s14
      %p169 = scmp.lt.s32.totalorder %s168, 63
      %s170 = scalar_select %p169, %s168, 63
      %s171 = smul.addr %s170, 8
      %s172 = scalar_lea.vmem %s3, %s171
      %s173 = smul.u32 32, %s14
      %v174 = vld [vmem:[%s166] sm:$0xff]
      %v175 = vld [vmem:[%s166 + $0x8] sm:$0xff]
      %v176 = vld [vmem:[%s166 + $0x10] sm:$0xff]
      %v177 = vld [vmem:[%s166 + $0x18] sm:$0xff]
      %v178 = vld [vmem:[%s166 + $0x20] sm:$0xff]
      %v179 = vld [vmem:[%s166 + $0x28] sm:$0xff]
      %v180 = vld [vmem:[%s166 + $0x30] sm:$0xff]
      %v181 = vld [vmem:[%s166 + $0x38] sm:$0xff]
      %v182 = vld [vmem:[%s166 + $0x40] sm:$0xff]
      %v183 = vld [vmem:[%s166 + $0x48] sm:$0xff]
      %v184 = vld [vmem:[%s166 + $0x50] sm:$0xff]
      %v185 = vld [vmem:[%s166 + $0x58] sm:$0xff]
      %v186 = vld [vmem:[%s166 + $0x60] sm:$0xff]
      %v187 = vld [vmem:[%s166 + $0x68] sm:$0xff]
      %v188 = vld [vmem:[%s166 + $0x70] sm:$0xff]
      %v189 = vld [vmem:[%s166 + $0x78] sm:$0xff]
      %v190 = vld [vmem:[%s166 + $0x80] sm:$0xff]
      %v191 = vld [vmem:[%s166 + $0x88] sm:$0xff]
      %v192 = vld [vmem:[%s166 + $0x90] sm:$0xff]
      %v193 = vld [vmem:[%s166 + $0x98] sm:$0xff]
      %v194 = vld [vmem:[%s166 + $0xa0] sm:$0xff]
      %v195 = vld [vmem:[%s166 + $0xa8] sm:$0xff]
      %v196 = vld [vmem:[%s166 + $0xb0] sm:$0xff]
      %v197 = vld [vmem:[%s166 + $0xb8] sm:$0xff]
      %v198 = vld [vmem:[%s166 + $0xc0] sm:$0xff]
      %v199 = vld [vmem:[%s166 + $0xc8] sm:$0xff]
      %v200 = vld [vmem:[%s166 + $0xd0] sm:$0xff]
      %v201 = vld [vmem:[%s166 + $0xd8] sm:$0xff]
      %v202 = vld [vmem:[%s166 + $0xe0] sm:$0xff]
      %v203 = vld [vmem:[%s166 + $0xe8] sm:$0xff]
      %v204 = vld [vmem:[%s166 + $0xf0] sm:$0xff]
      %v205 = vld [vmem:[%s166 + $0xf8] sm:$0xff]
      %v206 = vld [vmem:[%s1] sm:$0x1]
      %v208 = vlaneseq
      %v209 = vshrl.u32 %v208, 7
      %v210 = vsub.s32 0, %v209
      %v211 = vrot.slane %v206, %v210
      %v213 = vmul.f32 %v174, %v211
      %v214 = vmul.f32 %v175, %v211
      %v215 = vmul.f32 %v176, %v211
      %v216 = vmul.f32 %v177, %v211
      %v217 = vmul.f32 %v178, %v211
      %v218 = vmul.f32 %v179, %v211
      %v219 = vmul.f32 %v180, %v211
      %v220 = vmul.f32 %v181, %v211
      %v221 = vmul.f32 %v182, %v211
      %v222 = vmul.f32 %v183, %v211
      %v223 = vmul.f32 %v184, %v211
      %v224 = vmul.f32 %v185, %v211
      %v225 = vmul.f32 %v186, %v211
      %v226 = vmul.f32 %v187, %v211
      %v227 = vmul.f32 %v188, %v211
      %v228 = vmul.f32 %v189, %v211
      %v229 = vmul.f32 %v190, %v211
      %v230 = vmul.f32 %v191, %v211
      %v231 = vmul.f32 %v192, %v211
      %v232 = vmul.f32 %v193, %v211
      %v233 = vmul.f32 %v194, %v211
      %v234 = vmul.f32 %v195, %v211
      %v235 = vmul.f32 %v196, %v211
      %v236 = vmul.f32 %v197, %v211
      %v237 = vmul.f32 %v198, %v211
      %v238 = vmul.f32 %v199, %v211
      %v239 = vmul.f32 %v200, %v211
      %v240 = vmul.f32 %v201, %v211
      %v241 = vmul.f32 %v202, %v211
      %v242 = vmul.f32 %v203, %v211
      %v243 = vmul.f32 %v204, %v211
      %v244 = vmul.f32 %v205, %v211
      %v245 = vld [vmem:[%s2] sm:$0x1]
      %v247 = vlaneseq
      %v248 = vshrl.u32 %v247, 7
      %v249 = vsub.s32 0, %v248
      %v250 = vrot.slane %v245, %v249
      %v252 = vadd.f32 %v213, %v250
      %v253 = vadd.f32 %v214, %v250
      %v254 = vadd.f32 %v215, %v250
      %v255 = vadd.f32 %v216, %v250
      %v256 = vadd.f32 %v217, %v250
      %v257 = vadd.f32 %v218, %v250
      %v258 = vadd.f32 %v219, %v250
      %v259 = vadd.f32 %v220, %v250
      %v260 = vadd.f32 %v221, %v250
      %v261 = vadd.f32 %v222, %v250
      %v262 = vadd.f32 %v223, %v250
      %v263 = vadd.f32 %v224, %v250
      %v264 = vadd.f32 %v225, %v250
      %v265 = vadd.f32 %v226, %v250
      %v266 = vadd.f32 %v227, %v250
      %v267 = vadd.f32 %v228, %v250
      %v268 = vadd.f32 %v229, %v250
      %v269 = vadd.f32 %v230, %v250
      %v270 = vadd.f32 %v231, %v250
      %v271 = vadd.f32 %v232, %v250
      %v272 = vadd.f32 %v233, %v250
      %v273 = vadd.f32 %v234, %v250
      %v274 = vadd.f32 %v235, %v250
      %v275 = vadd.f32 %v236, %v250
      %v276 = vadd.f32 %v237, %v250
      %v277 = vadd.f32 %v238, %v250
      %v278 = vadd.f32 %v239, %v250
      %v279 = vadd.f32 %v240, %v250
      %v280 = vadd.f32 %v241, %v250
      %v281 = vadd.f32 %v242, %v250
      %v282 = vadd.f32 %v243, %v250
      %v283 = vadd.f32 %v244, %v250
      %v284 = vmax.f32 %v252, 0.0
      %v285 = vmax.f32 %v253, 0.0
      %v286 = vmax.f32 %v254, 0.0
      %v287 = vmax.f32 %v255, 0.0
      %v288 = vmax.f32 %v256, 0.0
      %v289 = vmax.f32 %v257, 0.0
      %v290 = vmax.f32 %v258, 0.0
      %v291 = vmax.f32 %v259, 0.0
      %v292 = vmax.f32 %v260, 0.0
      %v293 = vmax.f32 %v261, 0.0
      %v294 = vmax.f32 %v262, 0.0
      %v295 = vmax.f32 %v263, 0.0
      %v296 = vmax.f32 %v264, 0.0
      %v297 = vmax.f32 %v265, 0.0
      %v298 = vmax.f32 %v266, 0.0
      %v299 = vmax.f32 %v267, 0.0
      %v300 = vmax.f32 %v268, 0.0
      %v301 = vmax.f32 %v269, 0.0
      %v302 = vmax.f32 %v270, 0.0
      %v303 = vmax.f32 %v271, 0.0
      %v304 = vmax.f32 %v272, 0.0
      %v305 = vmax.f32 %v273, 0.0
      %v306 = vmax.f32 %v274, 0.0
      %v307 = vmax.f32 %v275, 0.0
      %v308 = vmax.f32 %v276, 0.0
      %v309 = vmax.f32 %v277, 0.0
      %v310 = vmax.f32 %v278, 0.0
      %v311 = vmax.f32 %v279, 0.0
      %v312 = vmax.f32 %v280, 0.0
      %v313 = vmax.f32 %v281, 0.0
      %v314 = vmax.f32 %v282, 0.0
      %v315 = vmax.f32 %v283, 0.0
      %vm316 = vcmask 97280
      %317 = vst.msk [vmem:[%s172] sm:$0xff] %vm316, %v284
      %318 = vst.msk [vmem:[%s172 + $0x8] sm:$0xff] %vm316, %v285
      %319 = vst.msk [vmem:[%s172 + $0x10] sm:$0xff] %vm316, %v286
      %320 = vst.msk [vmem:[%s172 + $0x18] sm:$0xff] %vm316, %v287
      %321 = vst.msk [vmem:[%s172 + $0x20] sm:$0xff] %vm316, %v288
      %322 = vst.msk [vmem:[%s172 + $0x28] sm:$0xff] %vm316, %v289
      %323 = vst.msk [vmem:[%s172 + $0x30] sm:$0xff] %vm316, %v290
      %324 = vst.msk [vmem:[%s172 + $0x38] sm:$0xff] %vm316, %v291
      %325 = vst.msk [vmem:[%s172 + $0x40] sm:$0xff] %vm316, %v292
      %326 = vst.msk [vmem:[%s172 + $0x48] sm:$0xff] %vm316, %v293
      %327 = vst.msk [vmem:[%s172 + $0x50] sm:$0xff] %vm316, %v294
      %328 = vst.msk [vmem:[%s172 + $0x58] sm:$0xff] %vm316, %v295
      %329 = vst.msk [vmem:[%s172 + $0x60] sm:$0xff] %vm316, %v296
      %330 = vst.msk [vmem:[%s172 + $0x68] sm:$0xff] %vm316, %v297
      %331 = vst.msk [vmem:[%s172 + $0x70] sm:$0xff] %vm316, %v298
      %332 = vst.msk [vmem:[%s172 + $0x78] sm:$0xff] %vm316, %v299
      %333 = vst.msk [vmem:[%s172 + $0x80] sm:$0xff] %vm316, %v300
      %334 = vst.msk [vmem:[%s172 + $0x88] sm:$0xff] %vm316, %v301
      %335 = vst.msk [vmem:[%s172 + $0x90] sm:$0xff] %vm316, %v302
      %336 = vst.msk [vmem:[%s172 + $0x98] sm:$0xff] %vm316, %v303
      %337 = vst.msk [vmem:[%s172 + $0xa0] sm:$0xff] %vm316, %v304
      %338 = vst.msk [vmem:[%s172 + $0xa8] sm:$0xff] %vm316, %v305
      %339 = vst.msk [vmem:[%s172 + $0xb0] sm:$0xff] %vm316, %v306
      %340 = vst.msk [vmem:[%s172 + $0xb8] sm:$0xff] %vm316, %v307
      %341 = vst.msk [vmem:[%s172 + $0xc0] sm:$0xff] %vm316, %v308
      %342 = vst.msk [vmem:[%s172 + $0xc8] sm:$0xff] %vm316, %v309
      %343 = vst.msk [vmem:[%s172 + $0xd0] sm:$0xff] %vm316, %v310
      %344 = vst.msk [vmem:[%s172 + $0xd8] sm:$0xff] %vm316, %v311
      %345 = vst.msk [vmem:[%s172 + $0xe0] sm:$0xff] %vm316, %v312
      %346 = vst.msk [vmem:[%s172 + $0xe8] sm:$0xff] %vm316, %v313
      %347 = vst.msk [vmem:[%s172 + $0xf0] sm:$0xff] %vm316, %v314
      %348 = vst.msk [vmem:[%s172 + $0xf8] sm:$0xff] %vm316, %v315
      %s349 = smul.u32 32, %s14
      %p350 = scmp.lt.s32.totalorder %s349, 63
      %s351 = scalar_select %p350, %s349, 63
      %s352 = smul.addr %s351, 8
      %s353 = scalar_lea.vmem %s3, %s352
      // Predicated region
      $region33: #{conv_block2d.3} parent=31 // pred_check
        %p354 = pneg %p100
      $region34: #{conv_block2d.3} parent=31 // pred_check_branch
        %356 = sbr.rel (%p354) target = $region36
      $region35: #{conv_block2d.3} parent=31 // pred_region
        %s357 = smul.u32 32, %s14
      $region36: #{conv_block2d.3} parent=31 // pred_fallthru
        _
    $region32: #{conv_block2d.3} parent=5 // pred_fallthru
      _
    %p358 = scmp.le.s32.totalorder 2, %s9
    // Predicated region
    $region37: #{conv_block2d.3} parent=5 // pred_check
      %p359 = pneg %p358
    $region38: #{conv_block2d.3} parent=5 // pred_check_branch
      %361 = sbr.rel (%p359) target = $region40
    $region39: #{conv_block2d.3} parent=5 // pred_region
      %s362 = ssub.s32 %s9, 2
      // Predicated region
      $region41: #{conv_block2d.3} parent=39 // pred_check
        %p363 = pneg %p106
      $region42: #{conv_block2d.3} parent=39 // pred_check_branch
        %365 = sbr.rel (%p363) target = $region44
      $region43: #{conv_block2d.3} parent=39 // pred_region
        %s366 = smul.u32 32, %s15
        %p367 = scmp.lt.s32.totalorder %s366, 63
        %s368 = scalar_select %p367, %s366, 63
        %s369 = smul.addr %s368, 8
        %s370 = scalar_lea.vmem %s3, %s369
      $region44: #{conv_block2d.3} parent=39 // pred_fallthru
        _
    $region40: #{conv_block2d.3} parent=5 // pred_fallthru
      _
  $region6: #{conv_block2d.3} parent=0 // loop_footer
    %s13 = sadd.s32 1, %s9
  $region7: #{conv_block2d.3} parent=0 // loop_footer_branch
    %8 = sbr.rel target = $region3
  $region8: #{conv_block2d.3} parent=0 // loop_exit
    _

// kernel: conv_block2d.2
$region0: #{conv_block2d.2}
  #allocation0 [shape = 'u32[]', space=smem, size = 0x4, offset = 0x4, fixed_abs, tag = 'smem constant byte address 0x4 - core index']
  #allocation1 [shape = 'u32[144,128]{1,0:T(1,128)}', space=vmem, size = 0x12000, scoped, tag = 'internal scratch']
  %s0 = inlined_call_operand.vmem [shape: bf16[512,36], index: 0, kind: input, shape index: {}]
  %s1 = inlined_call_operand.vmem [shape: bf16[36,12], index: 1, kind: input, shape index: {}]
  %s2 = inlined_call_operand.vmem [shape: f32[512,12], index: 2, kind: output, shape index: {0}]
  %s3 = inlined_call_operand.vmem [shape: f32[2,1,12], index: 3, kind: output, shape index: {1}]
  %s4 = inlined_call_operand.vmem [shape: f32[2,1,12], index: 4, kind: output, shape index: {2}]
  %5 = xla_tuple %s2, %s3, %s4
  %s6 = sld [smem:[#allocation0]]
  $region57: #{conv_block2d.2} parent=0
    _
  %s8 = ssub.s32 1, %s6
  %s9 = scalar_select 0, %s8, %s6
  loop: start=0, step=1, limit=4
  $region2: #{conv_block2d.2} parent=0 // loop_pre_header
    _
  $region3: #{conv_block2d.2} parent=0 // loop_header
    %s11 = sphi 0, %s15
    %p12 = scmp.ge.s32.totalorder %s11, 4
    %s21 = sphi 0, %s23
    %s24 = sphi 0, %s21
    %s25 = sphi 0, %s24
    %s41 = sphi 0, %s25
    %s45 = sphi 0, %s45
    %s47 = sphi 0, %s45
    %s48 = sphi 0, %s47
    %s62 = sphi 0, %s48
    %s68 = sphi 0, %s70
    %s71 = sphi 0, %s68
    %s72 = sphi 0, %s71
    %s88 = sphi 0, %s72
    %s94 = sphi 0, %s96
    %s97 = sphi 0, %s94
    %s98 = sphi 0, %s97
    %s114 = sphi 0, %s98
    %s120 = sphi 0, %s122
    %s123 = sphi 0, %s120
    %s124 = sphi 0, %s123
    %s140 = sphi 0, %s124
  $region4: #{conv_block2d.2} parent=0 // loop_header_branch
    %14 = sbr.rel (%p12) target = $region8
  $region5: #{conv_block2d.2} parent=0 // loop_body
    %s16 = ssub.s32 %s11, 1
    %s17 = ssub.s32 %s11, 2
    %s18 = sadd.s32 %s11, 1
    %s19 = ssub.s32 %s11, %s18
    %p20 = scmp.eq.s32.totalorder %s19, 0
    %s22 = sadd.s32 %s21, 1
    %s23 = scalar_select %p20, %s21, %s22
    %p26 = pneg %p20
    %p27 = scmp.eq.s32.totalorder %s11, 1
    %p28 = por %p26, %p27
    %p29 = scmp.ne.s32.totalorder %s21, %s24
    %p30 = scmp.eq.s32.totalorder %s11, 0
    %p31 = por %p29, %p30
    %p32 = scmp.ne.s32.totalorder %s21, %s24
    %p33 = scmp.eq.s32.totalorder %s16, 1
    %p34 = por %p32, %p33
    %p35 = scmp.ne.s32.totalorder %s24, %s25
    %p36 = scmp.eq.s32.totalorder %s16, 0
    %p37 = por %p35, %p36
    %p38 = scmp.ne.s32.totalorder %s24, %s25
    %p39 = scmp.eq.s32.totalorder %s17, 1
    %p40 = por %p38, %p39
    %p42 = scmp.ne.s32.totalorder %s25, %s41
    %p43 = scmp.eq.s32.totalorder %s17, 0
    %p44 = por %p42, %p43
    %s46 = sadd.s32 %s45, 1
    %p49 = scmp.eq.s32.totalorder %s11, 1
    %p50 = scmp.ne.s32.totalorder %s45, %s47
    %p51 = scmp.eq.s32.totalorder %s11, 0
    %p52 = por %p50, %p51
    %p53 = scmp.ne.s32.totalorder %s45, %s47
    %p54 = scmp.eq.s32.totalorder %s16, 1
    %p55 = por %p53, %p54
    %p56 = scmp.ne.s32.totalorder %s47, %s48
    %p57 = scmp.eq.s32.totalorder %s16, 0
    %p58 = por %p56, %p57
    %p59 = scmp.ne.s32.totalorder %s47, %s48
    %p60 = scmp.eq.s32.totalorder %s17, 1
    %p61 = por %p59, %p60
    %p63 = scmp.ne.s32.totalorder %s48, %s62
    %p64 = scmp.eq.s32.totalorder %s17, 0
    %p65 = por %p63, %p64
    %s66 = ssub.s32 %s11, %s18
    %p67 = scmp.eq.s32.totalorder %s66, 0
    %s69 = sadd.s32 %s68, 1
    %s70 = scalar_select %p67, %s68, %s69
    %p73 = pneg %p67
    %p74 = scmp.eq.s32.totalorder %s11, 1
    %p75 = por %p73, %p74
    %p76 = scmp.ne.s32.totalorder %s68, %s71
    %p77 = scmp.eq.s32.totalorder %s11, 0
    %p78 = por %p76, %p77
    %p79 = scmp.ne.s32.totalorder %s68, %s71
    %p80 = scmp.eq.s32.totalorder %s16, 1
    %p81 = por %p79, %p80
    %p82 = scmp.ne.s32.totalorder %s71, %s72
    %p83 = scmp.eq.s32.totalorder %s16, 0
    %p84 = por %p82, %p83
    %p85 = scmp.ne.s32.totalorder %s71, %s72
    %p86 = scmp.eq.s32.totalorder %s17, 1
    %p87 = por %p85, %p86
    %p89 = scmp.ne.s32.totalorder %s72, %s88
    %p90 = scmp.eq.s32.totalorder %s17, 0
    %p91 = por %p89, %p90
    %s92 = ssub.s32 %s11, %s18
    %p93 = scmp.eq.s32.totalorder %s92, 0
    %s95 = sadd.s32 %s94, 1
    %s96 = scalar_select %p93, %s94, %s95
    %p99 = pneg %p93
    %p100 = scmp.eq.s32.totalorder %s11, 1
    %p101 = por %p99, %p100
    %p102 = scmp.ne.s32.totalorder %s94, %s97
    %p103 = scmp.eq.s32.totalorder %s11, 0
    %p104 = por %p102, %p103
    %p105 = scmp.ne.s32.totalorder %s94, %s97
    %p106 = scmp.eq.s32.totalorder %s16, 1
    %p107 = por %p105, %p106
    %p108 = scmp.ne.s32.totalorder %s97, %s98
    %p109 = scmp.eq.s32.totalorder %s16, 0
    %p110 = por %p108, %p109
    %p111 = scmp.ne.s32.totalorder %s97, %s98
    %p112 = scmp.eq.s32.totalorder %s17, 1
    %p113 = por %p111, %p112
    %p115 = scmp.ne.s32.totalorder %s98, %s114
    %p116 = scmp.eq.s32.totalorder %s17, 0
    %p117 = por %p115, %p116
    %s118 = ssub.s32 %s11, %s18
    %p119 = scmp.eq.s32.totalorder %s118, 0
    %s121 = sadd.s32 %s120, 1
    %s122 = scalar_select %p119, %s120, %s121
    %p125 = pneg %p119
    %p126 = scmp.eq.s32.totalorder %s11, 1
    %p127 = por %p125, %p126
    %p128 = scmp.ne.s32.totalorder %s120, %s123
    %p129 = scmp.eq.s32.totalorder %s11, 0
    %p130 = por %p128, %p129
    %p131 = scmp.ne.s32.totalorder %s120, %s123
    %p132 = scmp.eq.s32.totalorder %s16, 1
    %p133 = por %p131, %p132
    %p134 = scmp.ne.s32.totalorder %s123, %s124
    %p135 = scmp.eq.s32.totalorder %s16, 0
    %p136 = por %p134, %p135
    %p137 = scmp.ne.s32.totalorder %s123, %s124
    %p138 = scmp.eq.s32.totalorder %s17, 1
    %p139 = por %p137, %p138
    %p141 = scmp.ne.s32.totalorder %s124, %s140
    %p142 = scmp.eq.s32.totalorder %s17, 0
    %p143 = por %p141, %p142
    %p144 = scmp.le.s32.totalorder 1, %s11
    %p145 = scmp.lt.s32.totalorder %s11, 3
    %p146 = pnand %p144, %p145
    %p147 = pneg %p146
    // Predicated region
    $region9: #{conv_block2d.2} parent=5 // pred_check
      _
    $region10: #{conv_block2d.2} parent=5 // pred_check_branch
      %149 = sbr.rel (%p146) target = $region12
    $region11: #{conv_block2d.2} parent=5 // pred_region
      %s150 = ssub.s32 %s11, 1
      // Predicated region
      $region13: #{conv_block2d.2} parent=11 // pred_check
        %p151 = pneg %p58
      $region14: #{conv_block2d.2} parent=11 // pred_check_branch
        %153 = sbr.rel (%p151) target = $region16
      $region15: #{conv_block2d.2} parent=11 // pred_region
        _
      $region16: #{conv_block2d.2} parent=11 // pred_fallthru
        _
    $region12: #{conv_block2d.2} parent=5 // pred_fallthru
      _
    %p154 = scmp.lt.s32.totalorder %s11, 2
    // Predicated region
    $region17: #{conv_block2d.2} parent=5 // pred_check
      %p155 = pneg %p154
    $region18: #{conv_block2d.2} parent=5 // pred_check_branch
      %157 = sbr.rel (%p155) target = $region20
    $region19: #{conv_block2d.2} parent=5 // pred_region
      // Predicated region
      $region21: #{conv_block2d.2} parent=19 // pred_check
        %p158 = pneg %p31
      $region22: #{conv_block2d.2} parent=19 // pred_check_branch
        %160 = sbr.rel (%p158) target = $region24
      $region23: #{conv_block2d.2} parent=19 // pred_region
        %s161 = smul.u32 32, %s11
        %p162 = scmp.lt.s32.totalorder %s161, 63
        %s163 = scalar_select %p162, %s161, 63
        %s164 = smul.addr %s163, 4
        %s165 = scalar_lea.vmem %s0, %s164
        %s166 = smul.u32 32, %s11
      $region24: #{conv_block2d.2} parent=19 // pred_fallthru
        _
    $region20: #{conv_block2d.2} parent=5 // pred_fallthru
      _
    %p167 = scmp.le.s32.totalorder 1, %s11
    %p168 = scmp.lt.s32.totalorder %s11, 3
    %p169 = pnand %p167, %p168
    %p170 = pneg %p169
    // Predicated region
    $region25: #{conv_block2d.2} parent=5 // pred_check
      _
    $region26: #{conv_block2d.2} parent=5 // pred_check_branch
      %172 = sbr.rel (%p169) target = $region28
    $region27: #{conv_block2d.2} parent=5 // pred_region
      %s173 = ssub.s32 %s11, 1
      %s174 = smul.u32 32, %s16
      %p175 = scmp.lt.s32.totalorder %s174, 63
      %s176 = scalar_select %p175, %s174, 63
      %s177 = smul.addr %s176, 4
      %s178 = scalar_lea.vmem %s0, %s177
      %p179 = pneg %p37
      %p180 = pneg %p34
      %p181 = pneg %p58
      %p182 = pneg %p55
      %p183 = pneg %p84
      %p184 = pneg %p81
      %s185 = smul.u32 32, %s16
      %p186 = scmp.lt.s32.totalorder %s185, 63
      %s187 = scalar_select %p186, %s185, 63
      %s188 = smul.addr %s187, 8
      %s189 = scalar_lea.vmem %s2, %s188
      %p190 = pneg %p110
      %p191 = pneg %p107
      %p192 = scmp.lt.s32.totalorder %s16, 1
      %s193 = scalar_select %p192, %s16, 1
      %s194 = scalar_lea.vmem %s3, %s193
      %p195 = pneg %p136
      %p196 = pneg %p133
      %p197 = scmp.lt.s32.totalorder %s16, 1
      %s198 = scalar_select %p197, %s16, 1
      %s199 = scalar_lea.vmem %s4, %s198
      %s200 = smul.u32 32, %s16
      %p201 = scmp.lt.s32.totalorder %s200, 63
      %s202 = scalar_select %p201, %s200, 63
      %s203 = smul.addr %s202, 4
      %s204 = scalar_lea.vmem %s0, %s203
      %s205 = smul.u32 32, %s16
      %s206 = smul.u32 32, %s16
      %p207 = scmp.lt.s32.totalorder %s206, 63
      %s208 = scalar_select %p207, %s206, 63
      %s209 = smul.addr %s208, 8
      %s210 = scalar_lea.vmem %s2, %s209
      %s211 = smul.u32 32, %s16
      %p212 = scmp.lt.s32.totalorder %s16, 1
      %s213 = scalar_select %p212, %s16, 1
      %s214 = scalar_lea.vmem %s3, %s213
      %p215 = scmp.lt.s32.totalorder %s16, 1
      %s216 = scalar_select %p215, %s16, 1
      %s217 = scalar_lea.vmem %s4, %s216
      %v219 = vld [vmem:[%s204] sm:$0xf]
      %v220 = vld [vmem:[%s204 + $0x4] sm:$0xf]
      %v221 = vld [vmem:[%s204 + $0x8] sm:$0xf]
      %v222 = vld [vmem:[%s204 + $0xc] sm:$0xf]
      %v223 = vld [vmem:[%s204 + $0x10] sm:$0xf]
      %v224 = vld [vmem:[%s204 + $0x14] sm:$0xf]
      %v225 = vld [vmem:[%s204 + $0x18] sm:$0xf]
      %v226 = vld [vmem:[%s204 + $0x1c] sm:$0xf]
      %v227 = vld [vmem:[%s204 + $0x20] sm:$0xf]
      %v228 = vld [vmem:[%s204 + $0x24] sm:$0xf]
      %v229 = vld [vmem:[%s204 + $0x28] sm:$0xf]
      %v230 = vld [vmem:[%s204 + $0x2c] sm:$0xf]
      %v231 = vld [vmem:[%s204 + $0x30] sm:$0xf]
      %v232 = vld [vmem:[%s204 + $0x34] sm:$0xf]
      %v233 = vld [vmem:[%s204 + $0x38] sm:$0xf]
      %v234 = vld [vmem:[%s204 + $0x3c] sm:$0xf]
      %v235 = vld [vmem:[%s204 + $0x40] sm:$0xf]
      %v236 = vld [vmem:[%s204 + $0x44] sm:$0xf]
      %v237 = vld [vmem:[%s204 + $0x48] sm:$0xf]
      %v238 = vld [vmem:[%s204 + $0x4c] sm:$0xf]
      %v239 = vld [vmem:[%s204 + $0x50] sm:$0xf]
      %v240 = vld [vmem:[%s204 + $0x54] sm:$0xf]
      %v241 = vld [vmem:[%s204 + $0x58] sm:$0xf]
      %v242 = vld [vmem:[%s204 + $0x5c] sm:$0xf]
      %v243 = vld [vmem:[%s204 + $0x60] sm:$0xf]
      %v244 = vld [vmem:[%s204 + $0x64] sm:$0xf]
      %v245 = vld [vmem:[%s204 + $0x68] sm:$0xf]
      %v246 = vld [vmem:[%s204 + $0x6c] sm:$0xf]
      %v247 = vld [vmem:[%s204 + $0x70] sm:$0xf]
      %v248 = vld [vmem:[%s204 + $0x74] sm:$0xf]
      %v249 = vld [vmem:[%s204 + $0x78] sm:$0xf]
      %v250 = vld [vmem:[%s204 + $0x7c] sm:$0xf]
      %v251 = vld [vmem:[%s1] sm:$0xf]
      %v252 = vld [vmem:[%s1 + $0x4] sm:$0xf]
      %v253 = vld [vmem:[%s1 + $0x8] sm:$0xf]
      %v254 = vld [vmem:[%s1 + $0xc] sm:$0xf]
      %v255 = vld [vmem:[%s1 + $0x10] sm:$0x3]
      %v288 = vunpack.c.l.b16 %v219
      %v289 = vunpack.c.l.b16 %v220
      %v290 = vunpack.c.l.b16 %v221
      %v291 = vunpack.c.l.b16 %v222
      %v292 = vunpack.c.l.b16 %v223
      %v293 = vunpack.c.l.b16 %v224
      %v294 = vunpack.c.l.b16 %v225
      %v295 = vunpack.c.l.b16 %v226
      %v296 = vunpack.c.l.b16 %v227
      %v297 = vunpack.c.l.b16 %v228
      %v298 = vunpack.c.l.b16 %v229
      %v299 = vunpack.c.l.b16 %v230
      %v300 = vunpack.c.l.b16 %v231
      %v301 = vunpack.c.l.b16 %v232
      %v302 = vunpack.c.l.b16 %v233
      %v303 = vunpack.c.l.b16 %v234
      %v304 = vunpack.c.l.b16 %v235
      %v305 = vunpack.c.l.b16 %v236
      %v306 = vunpack.c.l.b16 %v237
      %v307 = vunpack.c.l.b16 %v238
      %v308 = vunpack.c.l.b16 %v239
      %v309 = vunpack.c.l.b16 %v240
      %v310 = vunpack.c.l.b16 %v241
      %v311 = vunpack.c.l.b16 %v242
      %v312 = vunpack.c.l.b16 %v243
      %v313 = vunpack.c.l.b16 %v244
      %v314 = vunpack.c.l.b16 %v245
      %v315 = vunpack.c.l.b16 %v246
      %v316 = vunpack.c.l.b16 %v247
      %v317 = vunpack.c.l.b16 %v248
      %v318 = vunpack.c.l.b16 %v249
      %v319 = vunpack.c.l.b16 %v250
      %v320 = vpack.c.b16 %v289, %v288
      %v321 = vpack.c.b16 %v291, %v290
      %v322 = vpack.c.b16 %v293, %v292
      %v323 = vpack.c.b16 %v295, %v294
      %v324 = vpack.c.b16 %v297, %v296
      %v325 = vpack.c.b16 %v299, %v298
      %v326 = vpack.c.b16 %v301, %v300
      %v327 = vpack.c.b16 %v303, %v302
      %v328 = vpack.c.b16 %v305, %v304
      %v329 = vpack.c.b16 %v307, %v306
      %v330 = vpack.c.b16 %v309, %v308
      %v331 = vpack.c.b16 %v311, %v310
      %v332 = vpack.c.b16 %v313, %v312
      %v333 = vpack.c.b16 %v315, %v314
      %v334 = vpack.c.b16 %v317, %v316
      %v335 = vpack.c.b16 %v319, %v318
      %v341 = vunpack.c.l.b16 %v251
      %v342 = vunpack.c.l.b16 %v252
      %v343 = vunpack.c.l.b16 %v253
      %v344 = vunpack.c.l.b16 %v254
      %v345 = vunpack.c.l.b16 %v255
      %v346 = vpack.c.b16 %v342, %v341
      %v347 = vpack.c.b16 %v344, %v343
      %v348 = vpack.c.b16 %v345, %v345
      %vm351 = vcmask 293888
      %v353 = vsel %vm351, %v320, 0
      %v356 = vsel %vm351, %v321, 0
      %v359 = vsel %vm351, %v322, 0
      %v362 = vsel %vm351, %v323, 0
      %v365 = vsel %vm351, %v324, 0
      %v368 = vsel %vm351, %v325, 0
      %v371 = vsel %vm351, %v326, 0
      %v374 = vsel %vm351, %v327, 0
      %v377 = vsel %vm351, %v328, 0
      %v380 = vsel %vm351, %v329, 0
      %v383 = vsel %vm351, %v330, 0
      %v386 = vsel %vm351, %v331, 0
      %v389 = vsel %vm351, %v332, 0
      %v392 = vsel %vm351, %v333, 0
      %v395 = vsel %vm351, %v334, 0
      %v398 = vsel %vm351, %v335, 0
      %vm400 = vcmask 1041408
      %v402 = vsel %vm400, %v348, 0
      %404 = vmatprep.subr.bf16.mxu0 0
      %405 = vmatpush1.bf16.msra.mxu0 0
      %406 = vmatprep.subr.bf16.mxu0 0
      %407 = vmatpush1.bf16.msra.mxu0 0
      %408 = vmatprep.subr.bf16.mxu0 0
      %409 = vmatpush1.bf16.msra.mxu0 0
      %410 = vmatprep.subr.bf16.mxu0 0
      %411 = vmatpush1.bf16.msra.mxu0 0
      %412 = vmatprep.subr.bf16.mxu0 0
      %413 = vmatpush1.bf16.msra.mxu0 0
      %414 = vmatprep.subr.bf16.mxu0 0
      %415 = vmatpush1.bf16.msra.mxu0 %v402
      %416 = vmatprep.subr.bf16.mxu0 0
      %417 = vmatpush1.bf16.msra.mxu0 %v347
      %418 = vmatprep.subr.bf16.mxu0 0
      %419 = vmatpush1.bf16.msra.mxu0 %v346
      %420 = vmatprep.subr.bf16.mxu0 0
      %421 = vmatpush2.bf16.msra.mxu0 0
      %422 = vmatprep.subr.bf16.mxu0 0
      %423 = vmatpush2.bf16.msra.mxu0 0
      %424 = vmatprep.subr.bf16.mxu0 0
      %425 = vmatpush2.bf16.msra.mxu0 0
      %426 = vmatprep.subr.bf16.mxu0 0
      %427 = vmatpush2.bf16.msra.mxu0 0
      %428 = vmatprep.subr.bf16.mxu0 0
      %429 = vmatpush2.bf16.msra.mxu0 0
      %430 = vmatprep.subr.bf16.mxu0 0
      %431 = vmatpush2.bf16.msra.mxu0 0
      %432 = vmatprep.subr.bf16.mxu0 0
      %433 = vmatpush2.bf16.msra.mxu0 0
      %434 = vmatprep.subr.bf16.mxu0 0
      %435 = vmatpush2.bf16.msra.mxu0 0
      %436 = vmatprep.mubr.bf16.mxu0 0
      %437 = vmatmul.mubr.bf16.gmra.mxu0 %v353
      %v438 = vpop.f32.mrf.mxu0
      %v439 = vadd.f32 0.0, %v438
      %v440 = vpop.f32.mrf.mxu0
      %v441 = vpop.f32.mrf.mxu0
      %v442 = vadd.f32 0.0, %v441
      %v443 = vpop.f32.mrf.mxu0
      %444 = vmatprep.mubr.bf16.mxu0 0
      %445 = vmatmul.mubr.bf16.gmra.mxu0 %v356
      %v446 = vpop.f32.mrf.mxu0
      %v447 = vadd.f32 0.0, %v446
      %v448 = vpop.f32.mrf.mxu0
      %v449 = vpop.f32.mrf.mxu0
      %v450 = vadd.f32 0.0, %v449
      %v451 = vpop.f32.mrf.mxu0
      %452 = vmatprep.mubr.bf16.mxu0 0
      %453 = vmatmul.mubr.bf16.gmra.mxu0 %v359
      %v454 = vpop.f32.mrf.mxu0
      %v455 = vadd.f32 0.0, %v454
      %v456 = vpop.f32.mrf.mxu0
      %v457 = vpop.f32.mrf.mxu0
      %v458 = vadd.f32 0.0, %v457
      %v459 = vpop.f32.mrf.mxu0
      %460 = vmatprep.mubr.bf16.mxu0 0
      %461 = vmatmul.mubr.bf16.gmra.mxu0 %v362
      %v462 = vpop.f32.mrf.mxu0
      %v463 = vadd.f32 0.0, %v462
      %v464 = vpop.f32.mrf.mxu0
      %v465 = vpop.f32.mrf.mxu0
      %v466 = vadd.f32 0.0, %v465
      %v467 = vpop.f32.mrf.mxu0
      %468 = vmatprep.mubr.bf16.mxu0 0
      %469 = vmatmul.mubr.bf16.gmra.mxu0 %v365
      %v470 = vpop.f32.mrf.mxu0
      %v471 = vadd.f32 0.0, %v470
      %v472 = vpop.f32.mrf.mxu0
      %v473 = vpop.f32.mrf.mxu0
      %v474 = vadd.f32 0.0, %v473
      %v475 = vpop.f32.mrf.mxu0
      %476 = vmatprep.mubr.bf16.mxu0 0
      %477 = vmatmul.mubr.bf16.gmra.mxu0 %v368
      %v478 = vpop.f32.mrf.mxu0
      %v479 = vadd.f32 0.0, %v478
      %v480 = vpop.f32.mrf.mxu0
      %v481 = vpop.f32.mrf.mxu0
      %v482 = vadd.f32 0.0, %v481
      %v483 = vpop.f32.mrf.mxu0
      %484 = vmatprep.mubr.bf16.mxu0 0
      %485 = vmatmul.mubr.bf16.gmra.mxu0 %v371
      %v486 = vpop.f32.mrf.mxu0
      %v487 = vadd.f32 0.0, %v486
      %v488 = vpop.f32.mrf.mxu0
      %v489 = vpop.f32.mrf.mxu0
      %v490 = vadd.f32 0.0, %v489
      %v491 = vpop.f32.mrf.mxu0
      %492 = vmatprep.mubr.bf16.mxu0 0
      %493 = vmatmul.mubr.bf16.gmra.mxu0 %v374
      %v494 = vpop.f32.mrf.mxu0
      %v495 = vadd.f32 0.0, %v494
      %v496 = vpop.f32.mrf.mxu0
      %v497 = vpop.f32.mrf.mxu0
      %v498 = vadd.f32 0.0, %v497
      %v499 = vpop.f32.mrf.mxu0
      %500 = vmatprep.mubr.bf16.mxu0 0
      %501 = vmatmul.mubr.bf16.gmra.mxu0 %v377
      %v502 = vpop.f32.mrf.mxu0
      %v503 = vadd.f32 0.0, %v502
      %v504 = vpop.f32.mrf.mxu0
      %v505 = vpop.f32.mrf.mxu0
      %v506 = vadd.f32 0.0, %v505
      %v507 = vpop.f32.mrf.mxu0
      %508 = vmatprep.mubr.bf16.mxu0 0
      %509 = vmatmul.mubr.bf16.gmra.mxu0 %v380
      %v510 = vpop.f32.mrf.mxu0
      %v511 = vadd.f32 0.0, %v510
      %v512 = vpop.f32.mrf.mxu0
      %v513 = vpop.f32.mrf.mxu0
      %v514 = vadd.f32 0.0, %v513
      %v515 = vpop.f32.mrf.mxu0
      %516 = vmatprep.mubr.bf16.mxu0 0
      %517 = vmatmul.mubr.bf16.gmra.mxu0 %v383
      %v518 = vpop.f32.mrf.mxu0
      %v519 = vadd.f32 0.0, %v518
      %v520 = vpop.f32.mrf.mxu0
      %v521 = vpop.f32.mrf.mxu0
      %v522 = vadd.f32 0.0, %v521
      %v523 = vpop.f32.mrf.mxu0
      %524 = vmatprep.mubr.bf16.mxu0 0
      %525 = vmatmul.mubr.bf16.gmra.mxu0 %v386
      %v526 = vpop.f32.mrf.mxu0
      %v527 = vadd.f32 0.0, %v526
      %v528 = vpop.f32.mrf.mxu0
      %v529 = vpop.f32.mrf.mxu0
      %v530 = vadd.f32 0.0, %v529
      %v531 = vpop.f32.mrf.mxu0
      %532 = vmatprep.mubr.bf16.mxu0 0
      %533 = vmatmul.mubr.bf16.gmra.mxu0 %v389
      %v534 = vpop.f32.mrf.mxu0
      %v535 = vadd.f32 0.0, %v534
      %v536 = vpop.f32.mrf.mxu0
      %v537 = vpop.f32.mrf.mxu0
      %v538 = vadd.f32 0.0, %v537
      %v539 = vpop.f32.mrf.mxu0
      %540 = vmatprep.mubr.bf16.mxu0 0
      %541 = vmatmul.mubr.bf16.gmra.mxu0 %v392
      %v542 = vpop.f32.mrf.mxu0
      %v543 = vadd.f32 0.0, %v542
      %v544 = vpop.f32.mrf.mxu0
      %v545 = vpop.f32.mrf.mxu0
      %v546 = vadd.f32 0.0, %v545
      %v547 = vpop.f32.mrf.mxu0
      %548 = vmatprep.mubr.bf16.mxu0 0
      %549 = vmatmul.mubr.bf16.gmra.mxu0 %v395
      %v550 = vpop.f32.mrf.mxu0
      %v551 = vadd.f32 0.0, %v550
      %v552 = vpop.f32.mrf.mxu0
      %v553 = vpop.f32.mrf.mxu0
      %v554 = vadd.f32 0.0, %v553
      %v555 = vpop.f32.mrf.mxu0
      %556 = vmatprep.mubr.bf16.mxu0 0
      %557 = vmatmul.mubr.bf16.gmra.mxu0 %v398
      %v558 = vpop.f32.mrf.mxu0
      %v559 = vadd.f32 0.0, %v558
      %v560 = vpop.f32.mrf.mxu0
      %v561 = vpop.f32.mrf.mxu0
      %v562 = vadd.f32 0.0, %v561
      %v563 = vpop.f32.mrf.mxu0
      %564 = vdwg.mxu0
      %vm565 = vcmask 97280
      %566 = vst.msk [vmem:[%s210] sm:$0xff] %vm565, %v439
      %567 = vst.msk [vmem:[%s210 + $0x8] sm:$0xff] %vm565, %v442
      %568 = vst.msk [vmem:[%s210 + $0x10] sm:$0xff] %vm565, %v447
      %569 = vst.msk [vmem:[%s210 + $0x18] sm:$0xff] %vm565, %v450
      %570 = vst.msk [vmem:[%s210 + $0x20] sm:$0xff] %vm565, %v455
      %571 = vst.msk [vmem:[%s210 + $0x28] sm:$0xff] %vm565, %v458
      %572 = vst.msk [vmem:[%s210 + $0x30] sm:$0xff] %vm565, %v463
      %573 = vst.msk [vmem:[%s210 + $0x38] sm:$0xff] %vm565, %v466
      %574 = vst.msk [vmem:[%s210 + $0x40] sm:$0xff] %vm565, %v471
      %575 = vst.msk [vmem:[%s210 + $0x48] sm:$0xff] %vm565, %v474
      %576 = vst.msk [vmem:[%s210 + $0x50] sm:$0xff] %vm565, %v479
      %577 = vst.msk [vmem:[%s210 + $0x58] sm:$0xff] %vm565, %v482
      %578 = vst.msk [vmem:[%s210 + $0x60] sm:$0xff] %vm565, %v487
      %579 = vst.msk [vmem:[%s210 + $0x68] sm:$0xff] %vm565, %v490
      %580 = vst.msk [vmem:[%s210 + $0x70] sm:$0xff] %vm565, %v495
      %581 = vst.msk [vmem:[%s210 + $0x78] sm:$0xff] %vm565, %v498
      %582 = vst.msk [vmem:[%s210 + $0x80] sm:$0xff] %vm565, %v503
      %583 = vst.msk [vmem:[%s210 + $0x88] sm:$0xff] %vm565, %v506
      %584 = vst.msk [vmem:[%s210 + $0x90] sm:$0xff] %vm565, %v511
      %585 = vst.msk [vmem:[%s210 + $0x98] sm:$0xff] %vm565, %v514
      %586 = vst.msk [vmem:[%s210 + $0xa0] sm:$0xff] %vm565, %v519
      %587 = vst.msk [vmem:[%s210 + $0xa8] sm:$0xff] %vm565, %v522
      %588 = vst.msk [vmem:[%s210 + $0xb0] sm:$0xff] %vm565, %v527
      %589 = vst.msk [vmem:[%s210 + $0xb8] sm:$0xff] %vm565, %v530
      %590 = vst.msk [vmem:[%s210 + $0xc0] sm:$0xff] %vm565, %v535
      %591 = vst.msk [vmem:[%s210 + $0xc8] sm:$0xff] %vm565, %v538
      %592 = vst.msk [vmem:[%s210 + $0xd0] sm:$0xff] %vm565, %v543
      %593 = vst.msk [vmem:[%s210 + $0xd8] sm:$0xff] %vm565, %v546
      %594 = vst.msk [vmem:[%s210 + $0xe0] sm:$0xff] %vm565, %v551
      %595 = vst.msk [vmem:[%s210 + $0xe8] sm:$0xff] %vm565, %v554
      %596 = vst.msk [vmem:[%s210 + $0xf0] sm:$0xff] %vm565, %v559
      %597 = vst.msk [vmem:[%s210 + $0xf8] sm:$0xff] %vm565, %v562
      %v598 = vsel %vm565, %v439, 0.0
      %v599 = vsel %vm565, %v442, 0.0
      %v600 = vadd.f32 %v598, %v599
      %v601 = vsel %vm565, %v447, 0.0
      %v602 = vadd.f32 %v600, %v601
      %v603 = vsel %vm565, %v450, 0.0
      %v604 = vadd.f32 %v602, %v603
      %v605 = vsel %vm565, %v455, 0.0
      %v606 = vadd.f32 %v604, %v605
      %v607 = vsel %vm565, %v458, 0.0
      %v608 = vadd.f32 %v606, %v607
      %v609 = vsel %vm565, %v463, 0.0
      %v610 = vadd.f32 %v608, %v609
      %v611 = vsel %vm565, %v466, 0.0
      %v612 = vadd.f32 %v610, %v611
      %v613 = vsel %vm565, %v471, 0.0
      %v614 = vadd.f32 %v612, %v613
      %v615 = vsel %vm565, %v474, 0.0
      %v616 = vadd.f32 %v614, %v615
      %v617 = vsel %vm565, %v479, 0.0
      %v618 = vadd.f32 %v616, %v617
      %v619 = vsel %vm565, %v482, 0.0
      %v620 = vadd.f32 %v618, %v619
      %v621 = vsel %vm565, %v487, 0.0
      %v622 = vadd.f32 %v620, %v621
      %v623 = vsel %vm565, %v490, 0.0
      %v624 = vadd.f32 %v622, %v623
      %v625 = vsel %vm565, %v495, 0.0
      %v626 = vadd.f32 %v624, %v625
      %v627 = vsel %vm565, %v498, 0.0
      %v628 = vadd.f32 %v626, %v627
      %v629 = vsel %vm565, %v503, 0.0
      %v630 = vadd.f32 %v628, %v629
      %v631 = vsel %vm565, %v506, 0.0
      %v632 = vadd.f32 %v630, %v631
      %v633 = vsel %vm565, %v511, 0.0
      %v634 = vadd.f32 %v632, %v633
      %v635 = vsel %vm565, %v514, 0.0
      %v636 = vadd.f32 %v634, %v635
      %v637 = vsel %vm565, %v519, 0.0
      %v638 = vadd.f32 %v636, %v637
      %v639 = vsel %vm565, %v522, 0.0
      %v640 = vadd.f32 %v638, %v639
      %v641 = vsel %vm565, %v527, 0.0
      %v642 = vadd.f32 %v640, %v641
      %v643 = vsel %vm565, %v530, 0.0
      %v644 = vadd.f32 %v642, %v643
      %v645 = vsel %vm565, %v535, 0.0
      %v646 = vadd.f32 %v644, %v645
      %v647 = vsel %vm565, %v538, 0.0
      %v648 = vadd.f32 %v646, %v647
      %v649 = vsel %vm565, %v543, 0.0
      %v650 = vadd.f32 %v648, %v649
      %v651 = vsel %vm565, %v546, 0.0
      %v652 = vadd.f32 %v650, %v651
      %v653 = vsel %vm565, %v551, 0.0
      %v654 = vadd.f32 %v652, %v653
      %v655 = vsel %vm565, %v554, 0.0
      %v656 = vadd.f32 %v654, %v655
      %v657 = vsel %vm565, %v559, 0.0
      %v658 = vadd.f32 %v656, %v657
      %v659 = vsel %vm565, %v562, 0.0
      %v660 = vadd.f32 %v658, %v659
      %v661 = vrot.slane %v660, 4
      %v662 = vadd.f32 %v660, %v661
      %v663 = vrot.slane %v662, 2
      %v664 = vadd.f32 %v662, %v663
      %v665 = vrot.slane %v664, 1
      %v666 = vadd.f32 %v664, %v665
      %vm667 = vcmask 90112
      %668 = vst.msk [vmem:[%s214] sm:$0x1] %vm667, %v666
      %v669 = vmul.f32 %v439, %v439
      %v670 = vmul.f32 %v442, %v442
      %v671 = vmul.f32 %v447, %v447
      %v672 = vmul.f32 %v450, %v450
      %v673 = vmul.f32 %v455, %v455
      %v674 = vmul.f32 %v458, %v458
      %v675 = vmul.f32 %v463, %v463
      %v676 = vmul.f32 %v466, %v466
      %v677 = vmul.f32 %v471, %v471
      %v678 = vmul.f32 %v474, %v474
      %v679 = vmul.f32 %v479, %v479
      %v680 = vmul.f32 %v482, %v482
      %v681 = vmul.f32 %v487, %v487
      %v682 = vmul.f32 %v490, %v490
      %v683 = vmul.f32 %v495, %v495
      %v684 = vmul.f32 %v498, %v498
      %v685 = vmul.f32 %v503, %v503
      %v686 = vmul.f32 %v506, %v506
      %v687 = vmul.f32 %v511, %v511
      %v688 = vmul.f32 %v514, %v514
      %v689 = vmul.f32 %v519, %v519
      %v690 = vmul.f32 %v522, %v522
      %v691 = vmul.f32 %v527, %v527
      %v692 = vmul.f32 %v530, %v530
      %v693 = vmul.f32 %v535, %v535
      %v694 = vmul.f32 %v538, %v538
      %v695 = vmul.f32 %v543, %v543
      %v696 = vmul.f32 %v546, %v546
      %v697 = vmul.f32 %v551, %v551
      %v698 = vmul.f32 %v554, %v554
      %v699 = vmul.f32 %v559, %v559
      %v700 = vmul.f32 %v562, %v562
      %v701 = vsel %vm565, %v669, 0.0
      %v702 = vsel %vm565, %v670, 0.0
      %v703 = vadd.f32 %v701, %v702
      %v704 = vsel %vm565, %v671, 0.0
      %v705 = vadd.f32 %v703, %v704
      %v706 = vsel %vm565, %v672, 0.0
      %v707 = vadd.f32 %v705, %v706
      %v708 = vsel %vm565, %v673, 0.0
      %v709 = vadd.f32 %v707, %v708
      %v710 = vsel %vm565, %v674, 0.0
      %v711 = vadd.f32 %v709, %v710
      %v712 = vsel %vm565, %v675, 0.0
      %v713 = vadd.f32 %v711, %v712
      %v714 = vsel %vm565, %v676, 0.0
      %v715 = vadd.f32 %v713, %v714
      %v716 = vsel %vm565, %v677, 0.0
      %v717 = vadd.f32 %v715, %v716
      %v718 = vsel %vm565, %v678, 0.0
      %v719 = vadd.f32 %v717, %v718
      %v720 = vsel %vm565, %v679, 0.0
      %v721 = vadd.f32 %v719, %v720
      %v722 = vsel %vm565, %v680, 0.0
      %v723 = vadd.f32 %v721, %v722
      %v724 = vsel %vm565, %v681, 0.0
      %v725 = vadd.f32 %v723, %v724
      %v726 = vsel %vm565, %v682, 0.0
      %v727 = vadd.f32 %v725, %v726
      %v728 = vsel %vm565, %v683, 0.0
      %v729 = vadd.f32 %v727, %v728
      %v730 = vsel %vm565, %v684, 0.0
      %v731 = vadd.f32 %v729, %v730
      %v732 = vsel %vm565, %v685, 0.0
      %v733 = vadd.f32 %v731, %v732
      %v734 = vsel %vm565, %v686, 0.0
      %v735 = vadd.f32 %v733, %v734
      %v736 = vsel %vm565, %v687, 0.0
      %v737 = vadd.f32 %v735, %v736
      %v738 = vsel %vm565, %v688, 0.0
      %v739 = vadd.f32 %v737, %v738
      %v740 = vsel %vm565, %v689, 0.0
      %v741 = vadd.f32 %v739, %v740
      %v742 = vsel %vm565, %v690, 0.0
      %v743 = vadd.f32 %v741, %v742
      %v744 = vsel %vm565, %v691, 0.0
      %v745 = vadd.f32 %v743, %v744
      %v746 = vsel %vm565, %v692, 0.0
      %v747 = vadd.f32 %v745, %v746
      %v748 = vsel %vm565, %v693, 0.0
      %v749 = vadd.f32 %v747, %v748
      %v750 = vsel %vm565, %v694, 0.0
      %v751 = vadd.f32 %v749, %v750
      %v752 = vsel %vm565, %v695, 0.0
      %v753 = vadd.f32 %v751, %v752
      %v754 = vsel %vm565, %v696, 0.0
      %v755 = vadd.f32 %v753, %v754
      %v756 = vsel %vm565, %v697, 0.0
      %v757 = vadd.f32 %v755, %v756
      %v758 = vsel %vm565, %v698, 0.0
      %v759 = vadd.f32 %v757, %v758
      %v760 = vsel %vm565, %v699, 0.0
      %v761 = vadd.f32 %v759, %v760
      %v762 = vsel %vm565, %v700, 0.0
      %v763 = vadd.f32 %v761, %v762
      %v764 = vrot.slane %v763, 4
      %v765 = vadd.f32 %v763, %v764
      %v766 = vrot.slane %v765, 2
      %v767 = vadd.f32 %v765, %v766
      %v768 = vrot.slane %v767, 1
      %v769 = vadd.f32 %v767, %v768
      %770 = vst.msk [vmem:[%s217] sm:$0x1] %vm667, %v769
      %s771 = smul.u32 32, %s16
      %p772 = scmp.lt.s32.totalorder %s771, 63
      %s773 = scalar_select %p772, %s771, 63
      %s774 = smul.addr %s773, 8
      %s775 = scalar_lea.vmem %s2, %s774
      %p776 = scmp.lt.s32.totalorder %s16, 1
      %s777 = scalar_select %p776, %s16, 1
      %s778 = scalar_lea.vmem %s3, %s777
      %p779 = scmp.lt.s32.totalorder %s16, 1
      %s780 = scalar_select %p779, %s16, 1
      %s781 = scalar_lea.vmem %s4, %s780
      // Predicated region
      $region29: #{conv_block2d.2} parent=27 // pred_check
        %p782 = pneg %p81
      $region30: #{conv_block2d.2} parent=27 // pred_check_branch
        %784 = sbr.rel (%p782) target = $region32
      $region31: #{conv_block2d.2} parent=27 // pred_region
        %s785 = smul.u32 32, %s16
      $region32: #{conv_block2d.2} parent=27 // pred_fallthru
        _
      // Predicated region
      $region33: #{conv_block2d.2} parent=27 // pred_check
        %p786 = pneg %p107
      $region34: #{conv_block2d.2} parent=27 // pred_check_branch
        %788 = sbr.rel (%p786) target = $region36
      $region35: #{conv_block2d.2} parent=27 // pred_region
        _
      $region36: #{conv_block2d.2} parent=27 // pred_fallthru
        _
      // Predicated region
      $region37: #{conv_block2d.2} parent=27 // pred_check
        %p789 = pneg %p133
      $region38: #{conv_block2d.2} parent=27 // pred_check_branch
        %791 = sbr.rel (%p789) target = $region40
      $region39: #{conv_block2d.2} parent=27 // pred_region
        _
      $region40: #{conv_block2d.2} parent=27 // pred_fallthru
        _
    $region28: #{conv_block2d.2} parent=5 // pred_fallthru
      _
    %p792 = scmp.le.s32.totalorder 2, %s11
    // Predicated region
    $region41: #{conv_block2d.2} parent=5 // pred_check
      %p793 = pneg %p792
    $region42: #{conv_block2d.2} parent=5 // pred_check_branch
      %795 = sbr.rel (%p793) target = $region44
    $region43: #{conv_block2d.2} parent=5 // pred_region
      %s796 = ssub.s32 %s11, 2
      // Predicated region
      $region45: #{conv_block2d.2} parent=43 // pred_check
        %p797 = pneg %p87
      $region46: #{conv_block2d.2} parent=43 // pred_check_branch
        %799 = sbr.rel (%p797) target = $region48
      $region47: #{conv_block2d.2} parent=43 // pred_region
        %s800 = smul.u32 32, %s17
        %p801 = scmp.lt.s32.totalorder %s800, 63
        %s802 = scalar_select %p801, %s800, 63
        %s803 = smul.addr %s802, 8
        %s804 = scalar_lea.vmem %s2, %s803
      $region48: #{conv_block2d.2} parent=43 // pred_fallthru
        _
      // Predicated region
      $region49: #{conv_block2d.2} parent=43 // pred_check
        %p805 = pneg %p113
      $region50: #{conv_block2d.2} parent=43 // pred_check_branch
        %807 = sbr.rel (%p805) target = $region52
      $region51: #{conv_block2d.2} parent=43 // pred_region
        %p808 = scmp.lt.s32.totalorder %s17, 1
        %s809 = scalar_select %p808, %s17, 1
        %s810 = scalar_lea.vmem %s3, %s809
      $region52: #{conv_block2d.2} parent=43 // pred_fallthru
        _
      // Predicated region
      $region53: #{conv_block2d.2} parent=43 // pred_check
        %p811 = pneg %p139
      $region54: #{conv_block2d.2} parent=43 // pred_check_branch
        %813 = sbr.rel (%p811) target = $region56
      $region55: #{conv_block2d.2} parent=43 // pred_region
        %p814 = scmp.lt.s32.totalorder %s17, 1
        %s815 = scalar_select %p814, %s17, 1
        %s816 = scalar_lea.vmem %s4, %s815
      $region56: #{conv_block2d.2} parent=43 // pred_fallthru
        _
    $region44: #{conv_block2d.2} parent=5 // pred_fallthru
      _
  $region6: #{conv_block2d.2} parent=0 // loop_footer
    %s15 = sadd.s32 1, %s11
  $region7: #{conv_block2d.2} parent=0 // loop_footer_branch
    %10 = sbr.rel target = $region3
  $region8: #{conv_block2d.2} parent=0 // loop_exit
    _

</llo_original>
